<compile_context>
chip_gen: v7x
topology: tpu7x:2x2x1
jax: 0.10.0
libtpu: 0.0.40
codegen_flags: <defaults>
</compile_context>

<pallas_src>
import functools

import jax
import jax.numpy as jnp
from jax.experimental import pallas as pl
from jax.experimental.pallas import tpu as pltpu


def _ringloss_kernel(radius_ref, x_ref, o_ref, acc_ref, *,
                     loss_type, loss_weight, n_rows, tile_n):
    # radius_ref: SMEM (1,)   f32 learnable radius
    # x_ref:      VMEM (TN,D) current row tile (native dtype)
    # o_ref:      SMEM (1,1)  f32 scalar loss
    # acc_ref:    SMEM (2,)   f32 running accumulators (S1, S2)
    i = pl.program_id(0)

    @pl.when(i == 0)
    def _():
        acc_ref[0] = 0.0
        acc_ref[1] = 0.0

    x = x_ref[...].astype(jnp.float32)                           # (TN, D)
    r = radius_ref[0]

    # Mask rows past the true batch size (padded last tile).
    row_ids = i * tile_n + jax.lax.broadcasted_iota(jnp.int32, (tile_n, 1), 0)
    valid = row_ids < n_rows                                     # (TN, 1) bool
    x = jnp.where(valid, x, 0.0)

    # torch.norm(x, dim=1): per-row L2 norm, kept 2-D for TPU layout.
    norms = jnp.sqrt(jnp.sum(x * x, axis=1, keepdims=True))      # (TN, 1)

    if loss_type == 0:
        d = norms - r
        acc_ref[0] += jnp.sum(jnp.where(valid, d * d, 0.0))
    elif loss_type == 1:
        d = norms - r
        acc_ref[0] += jnp.sum(jnp.where(valid, d * d, 0.0))      # S1
        acc_ref[1] += jnp.sum(jnp.where(valid, norms, 0.0))      # S2
    else:  # loss_type == 2: smooth_l1 is symmetric -> loss1 == loss2
        d = jnp.abs(norms - r)
        sl1 = jnp.where(d < 1.0, 0.5 * d * d, d - 0.5)
        acc_ref[0] += jnp.sum(jnp.where(valid, sl1, 0.0))

    @pl.when(i == pl.num_programs(0) - 1)
    def _():
        inv_n = 1.0 / float(n_rows)
        if loss_type == 0:
            o_ref[0, 0] = acc_ref[0] * inv_n * 0.5 * loss_weight
        elif loss_type == 1:
            denom = jnp.maximum(acc_ref[1] * inv_n, 0.5)
            o_ref[0, 0] = (acc_ref[0] * inv_n) / (denom * denom) * loss_weight
        else:
            o_ref[0, 0] = 2.0 * acc_ref[0] * inv_n * loss_weight


def _pick_tile_n(n, d, itemsize, max_tile_n, vmem_budget_bytes=24 * 1024 * 1024):
    """Largest row tile keeping the double-buffered x tile under the VMEM budget."""
    sublane = {4: 8, 2: 16, 1: 32}.get(itemsize, 8)
    max_rows = max(sublane, vmem_budget_bytes // (2 * d * itemsize))
    tn = min(max_tile_n, max_rows)
    tn = max(sublane, (tn // sublane) * sublane)                 # sublane-aligned
    n_padded = ((n + sublane - 1) // sublane) * sublane
    return min(tn, n_padded)                                     # no bigger than needed


def ring_loss(x, radius, *, loss_type=0, loss_weight=1.0, max_tile_n=1024):
    """Forward RingLoss. x: (N, D) features; radius: scalar parameter of shape (1,)."""
    n, d = x.shape
    itemsize = jnp.dtype(x.dtype).itemsize
    tile_n = _pick_tile_n(n, d, itemsize, max_tile_n)
    grid = (pl.cdiv(n, tile_n),)

    radius_smem = jnp.asarray(radius, jnp.float32).reshape(1)

    kernel = functools.partial(
        _ringloss_kernel,
        loss_type=int(loss_type),
        loss_weight=float(loss_weight),
        n_rows=int(n),
        tile_n=int(tile_n),
    )

    out = pl.pallas_call(
        kernel,
        out_shape=jax.ShapeDtypeStruct((1, 1), jnp.float32),
        grid=grid,
        in_specs=[
            pl.BlockSpec(memory_space=pltpu.SMEM),               # radius scalar
            pl.BlockSpec((tile_n, d), lambda i: (i, 0)),         # streamed x tiles
        ],
        out_specs=pl.BlockSpec(memory_space=pltpu.SMEM),         # scalar loss
        scratch_shapes=[pltpu.SMEM((2,), jnp.float32)],          # (S1, S2) accumulators
        compiler_params=pltpu.CompilerParams(
            dimension_semantics=("arbitrary",)),
        cost_estimate=pl.CostEstimate(
            flops=2 * n * d,
            transcendentals=n,                                   # one sqrt per row
            bytes_accessed=n * d * itemsize + 8),
    )(radius_smem, x)
    return out[0, 0]


def _ring_loss_ref(x, radius, *, loss_type=0, loss_weight=1.0):
    norms = jnp.linalg.norm(x.astype(jnp.float32), axis=1)
    r = jnp.asarray(radius, jnp.float32).reshape(())
    if loss_type == 0:
        diff = norms - r
        return jnp.mean(diff * diff) * 0.5 * loss_weight
    elif loss_type == 1:
        denom = jnp.maximum(jnp.mean(norms), 0.5)
        diff = (norms - r) / denom
        return jnp.mean(diff * diff) * loss_weight
    else:
        d = jnp.abs(norms - r)
        sl1 = jnp.mean(jnp.where(d < 1.0, 0.5 * d * d, d - 0.5))
        return 2.0 * sl1 * loss_weight


if __name__ == "__main__":
    key = jax.random.PRNGKey(0)
    N, D = 8, 128                       # small feature-embedding batch
    x = jax.random.normal(key, (N, D), dtype=jnp.float32)

    # Parameter init as in the module: radius filled with 1.0 (shape (1,)).
    radius = jnp.ones((1,), dtype=jnp.float32)

    # All three loss types on the basic shape.
    for lt in (0, 1, 2):
        out = ring_loss(x, radius, loss_type=lt, loss_weight=1.0)
        jax.block_until_ready(out)
        ref = _ring_loss_ref(x, radius, loss_type=lt, loss_weight=1.0)
        assert jnp.allclose(out, ref, rtol=1e-5, atol=1e-5), (lt, out, ref)

    # Batch not a multiple of the sublane tile -> exercises padded-row masking.
    x2 = jax.random.normal(jax.random.PRNGKey(1), (20, 128), dtype=jnp.float32)
    out2 = ring_loss(x2, radius, loss_type=0, loss_weight=0.01)
    jax.block_until_ready(out2)
    ref2 = _ring_loss_ref(x2, radius, loss_type=0, loss_weight=0.01)
    assert jnp.allclose(out2, ref2, rtol=1e-5, atol=1e-5), (out2, ref2)

    # Force multiple grid steps (tile of 8 rows over 24 rows) -> exercises the
    # cross-step SMEM accumulation and the single-pass loss_type==1 path.
    x3 = jax.random.normal(jax.random.PRNGKey(2), (24, 128), dtype=jnp.float32)
    out3 = ring_loss(x3, radius, loss_type=1, loss_weight=1.0, max_tile_n=8)
    jax.block_until_ready(out3)
    ref3 = _ring_loss_ref(x3, radius, loss_type=1, loss_weight=1.0)
    assert jnp.allclose(out3, ref3, rtol=1e-5, atol=1e-5), (out3, ref3)

    print("KERNEL_OK")
</pallas_src>

<mosaic_0001>
module attributes {stable_mosaic.version = 11 : i64} {
  func.func @_ringloss_kernel(%arg0: i32, %arg1: memref<1xf32, #tpu.memory_space<smem>>, %arg2: memref<8x128xf32, #tpu.memory_space<vmem>>, %arg3: memref<1x1xf32, #tpu.memory_space<smem>>, %arg4: memref<2xf32, #tpu.memory_space<smem>>) attributes {dimension_semantics = [#tpu.dimension_semantics<arbitrary>], iteration_bounds = array<i64: 1>, scalar_prefetch = 0 : i64, scratch_operands = 1 : i64, tpu.core_type = #tpu.core_type<tc>, window_params = [{transform_indices = @transform_0, window_bounds = array<i64: 1>}, {transform_indices = @transform_1, window_bounds = array<i64: 8, 128>}, {transform_indices = @transform_2, window_bounds = array<i64: 1, 1>}]} {
    %c0_i32 = arith.constant 0 : i32
    %0 = arith.cmpi eq, %arg0, %c0_i32 : i32
    %1 = arith.extui %0 : i1 to i32
    %c0_i32_0 = arith.constant 0 : i32
    %2 = arith.cmpi ne, %1, %c0_i32_0 : i32
    scf.if %2 {
      %cst_11 = arith.constant 0.000000e+00 : f32
      %c0_12 = arith.constant 0 : index
      %34 = memref.load %arg4[%c0_12] : memref<2xf32, #tpu.memory_space<smem>>
      memref.store %cst_11, %arg4[%c0_12] : memref<2xf32, #tpu.memory_space<smem>>
      %cst_13 = arith.constant 0.000000e+00 : f32
      %c1 = arith.constant 1 : index
      %35 = memref.load %arg4[%c1] : memref<2xf32, #tpu.memory_space<smem>>
      memref.store %cst_13, %arg4[%c1] : memref<2xf32, #tpu.memory_space<smem>>
    } else {
    }
    %c0 = arith.constant 0 : index
    %c0_1 = arith.constant 0 : index
    %3 = vector.load %arg2[%c0, %c0_1] : memref<8x128xf32, #tpu.memory_space<vmem>>, vector<8x128xf32>
    %c0_2 = arith.constant 0 : index
    %4 = memref.load %arg1[%c0_2] : memref<1xf32, #tpu.memory_space<smem>>
    %c8_i32 = arith.constant 8 : i32
    %5 = arith.muli %arg0, %c8_i32 : i32
    %6 = tpu.iota {dimensions = array<i32: 0>} : vector<8x1xi32>
    %7 = vector.broadcast %5 : i32 to vector<8x1xi32>
    %8 = arith.addi %7, %6 : vector<8x1xi32>
    %c8_i32_3 = arith.constant 8 : i32
    %9 = vector.broadcast %c8_i32_3 : i32 to vector<8x1xi32>
    %10 = arith.cmpi slt, %8, %9 : vector<8x1xi32>
    %cst = arith.constant 0.000000e+00 : f32
    %11 = vector.shape_cast %10 : vector<8x1xi1> to vector<8x1xi1>
    %12 = vector.broadcast %11 : vector<8x1xi1> to vector<8x128xi1>
    %13 = vector.broadcast %cst : f32 to vector<8x128xf32>
    %14 = arith.select %12, %3, %13 : vector<8x128xi1>, vector<8x128xf32>
    %15 = arith.mulf %14, %14 : vector<8x128xf32>
    %cst_4 = arith.constant dense<0.000000e+00> : vector<8xf32>
    %16 = vector.multi_reduction <add>, %15, %cst_4 [1] : vector<8x128xf32> to vector<8xf32>
    %17 = vector.shape_cast %16 : vector<8xf32> to vector<8x1xf32>
    %18 = math.sqrt %17 : vector<8x1xf32>
    %19 = vector.broadcast %4 : f32 to vector<8x1xf32>
    %20 = arith.subf %18, %19 : vector<8x1xf32>
    %c0_5 = arith.constant 0 : index
    %21 = memref.load %arg4[%c0_5] : memref<2xf32, #tpu.memory_space<smem>>
    %22 = arith.mulf %20, %20 : vector<8x1xf32>
    %cst_6 = arith.constant 0.000000e+00 : f32
    %23 = vector.broadcast %cst_6 : f32 to vector<8x1xf32>
    %24 = arith.select %10, %22, %23 : vector<8x1xi1>, vector<8x1xf32>
    %25 = vector.shape_cast %24 : vector<8x1xf32> to vector<1x8x1xf32>
    %cst_7 = arith.constant dense<0.000000e+00> : vector<1xf32>
    %26 = vector.multi_reduction <add>, %25, %cst_7 [1, 2] : vector<1x8x1xf32> to vector<1xf32>
    %27 = vector.shape_cast %26 : vector<1xf32> to vector<1x1x1xf32>
    %28 = vector.extract %27[0, 0, 0] : f32 from vector<1x1x1xf32>
    %29 = arith.addf %21, %28 : f32
    %c0_8 = arith.constant 0 : index
    %30 = memref.load %arg4[%c0_8] : memref<2xf32, #tpu.memory_space<smem>>
    memref.store %29, %arg4[%c0_8] : memref<2xf32, #tpu.memory_space<smem>>
    %c0_i32_9 = arith.constant 0 : i32
    %31 = arith.cmpi eq, %arg0, %c0_i32_9 : i32
    %32 = arith.extui %31 : i1 to i32
    %c0_i32_10 = arith.constant 0 : i32
    %33 = arith.cmpi ne, %32, %c0_i32_10 : i32
    scf.if %33 {
      %c0_11 = arith.constant 0 : index
      %34 = memref.load %arg4[%c0_11] : memref<2xf32, #tpu.memory_space<smem>>
      %cst_12 = arith.constant 1.250000e-01 : f32
      %35 = arith.mulf %34, %cst_12 : f32
      %cst_13 = arith.constant 5.000000e-01 : f32
      %36 = arith.mulf %35, %cst_13 : f32
      %cst_14 = arith.constant 1.000000e+00 : f32
      %37 = arith.mulf %36, %cst_14 : f32
      %c0_15 = arith.constant 0 : index
      %c0_16 = arith.constant 0 : index
      %38 = memref.load %arg3[%c0_15, %c0_16] : memref<1x1xf32, #tpu.memory_space<smem>>
      memref.store %37, %arg3[%c0_15, %c0_16] : memref<1x1xf32, #tpu.memory_space<smem>>
    } else {
    }
    return
  }
  func.func @transform_0(%arg0: i32) -> i32 {
    %c0_i32 = arith.constant 0 : i32
    %c0_i32_0 = arith.constant 0 : i32
    return %c0_i32 : i32
  }
  func.func @transform_1(%arg0: i32) -> (i32, i32) {
    %c0_i32 = arith.constant 0 : i32
    %c0_i32_0 = arith.constant 0 : i32
    return %arg0, %c0_i32 : i32, i32
  }
  func.func @transform_2(%arg0: i32) -> (i32, i32) {
    %c0_i32 = arith.constant 0 : i32
    %c0_i32_0 = arith.constant 0 : i32
    %c0_i32_1 = arith.constant 0 : i32
    return %c0_i32, %c0_i32_0 : i32, i32
  }
}

</mosaic_0001>

<llo_original>
// kernel: tpu_custom_call.1
$region0: #{tpu_custom_call.1}
  #allocation0 [shape = 'u32[]', space=smem, size = 0x4, offset = 0x4, fixed_abs, tag = 'smem constant byte address 0x4 - core index']
  #allocation1 [shape = 'u32[144,128]{1,0:T(1,128)}', space=vmem, size = 0x12000, scoped, tag = 'internal scratch']
  #allocation2 [shape = 'f32[2]{0:T(128)}', space=smem, size = 0x200, scoped, tag = 'scratch operand']
  #allocation3 [shape = 'f32[1]{0:T(128)S(6)}', space=smem, size = 0x200, scoped, tag = 'scoped memory for tpu_custom_call.1']
  %s0 = inlined_call_operand.<no memory space> [shape: f32[1], index: 0, kind: input, shape index: {}]
  %s1 = inlined_call_operand.hbm [shape: f32[8,128], index: 1, kind: input, shape index: {}]
  %s2 = inlined_call_operand.hbm [shape: f32[1,1], index: 2, kind: output, shape index: {}]
  %s3 = sld [smem:[#allocation0]]
  $region30: #{tpu_custom_call.1} parent=0
    _
  %s5 = ssub.s32 1, %s3
  %s6 = scalar_select 0, %s5, %s3
  %7 = sst [smem:[#allocation3]] %s0
  $region1: #{tpu_custom_call.1} parent=0
    #allocation4 [shape = 'u8[4096]{0}', space=vmem, size = 0x1000, scoped, tag = 'input window, operand 1, single buffered']
    #allocation5 [shape = 's32[1]{0}', space=sflag, size = 0x4, scoped, tag = 'scoped memory for tpu_custom_call.1']
    #allocation6 [shape = 's32[1]{0}', space=sflag, size = 0x4, scoped, tag = 'scoped memory for tpu_custom_call.1']
    #allocation7 [shape = 'u8[512]{0}', space=smem, size = 0x200, scoped, tag = 'output window, operand 0, single buffered']
    %8 = vsyncpa [#allocation5], 0
    %9 = vsyncpa [#allocation6], 0
    // Predicated region
    $region2: #{tpu_custom_call.1} parent=1 // pred_check
      _
    $region3: #{tpu_custom_call.1} parent=1 // pred_check_branch
      %11 = sbr.rel (0) target = $region5
    $region4: #{tpu_custom_call.1} parent=1 // pred_region
      _
    $region5: #{tpu_custom_call.1} parent=1 // pred_fallthru
      _
    // Predicated region
    $region6: #{tpu_custom_call.1} parent=1 // pred_check
      _
    $region7: #{tpu_custom_call.1} parent=1 // pred_check_branch
      %13 = sbr.rel (0) target = $region9
    $region8: #{tpu_custom_call.1} parent=1 // pred_region
      %s15 = ssub.s32 128, 128
      %16 = vsyncadd [#allocation5], %s15
      %s18 = sshll.u32 [#allocation4], 4
      %s19 = int_to_ptr.vmem [resolvable:$true] %s18
      %21 = dma.hbm_to_vmem [thread:$0]  %s1, 128, %s19, [#allocation5]
    $region9: #{tpu_custom_call.1} parent=1 // pred_fallthru
      _
    // Predicated region
    $region10: #{tpu_custom_call.1} parent=1 // pred_check
      _
    $region11: #{tpu_custom_call.1} parent=1 // pred_check_branch
      %23 = sbr.rel (0) target = $region13
    $region12: #{tpu_custom_call.1} parent=1 // pred_region
      %24 = dma.done [#allocation5], 128
    $region13: #{tpu_custom_call.1} parent=1 // pred_fallthru
      _
    %p25 = scmp.eq.s32.totalorder 0, 0
    // Predicated region
    $region14: #{tpu_custom_call.1} parent=1 // pred_check
      %p26 = pneg %p25
    $region15: #{tpu_custom_call.1} parent=1 // pred_check_branch
      %28 = sbr.rel (%p26) target = $region17
    $region16: #{tpu_custom_call.1} parent=1 // pred_region
      %s29 = scalar_lea.smem [#allocation2], 0
      %30 = sst [smem:[%s29]] 0.0
      %s31 = scalar_lea.smem [#allocation2], 1
      %32 = sst [smem:[%s31]] 0.0
    $region17: #{tpu_custom_call.1} parent=1 // pred_fallthru
      _
    %v33 = vld [vmem:[#allocation4] sm:$0xff]
    %s34 = sld [smem:[#allocation3]]
    %s35 = smul.u32 0, 8
    %v36 = vlaneseq
    %v37 = vshrl.u32 %v36, 7
    %v38 = vstv %s35
    %v39 = vadd.s32 %v38, %v37
    %vm40 = vcmp.lt.s32.totalorder %v39, 8
    %v41 = vsel %vm40, 1, 0
    %vm42 = vcmp.eq.s32.totalorder %v41, 1
    %v43 = vsel %vm42, %v33, 0.0
    %v44 = vmul.f32 %v43, %v43
    %45 = vadd.xlane.f32.xlu0 %v44
    %v46 = vpop.xlane.xlu0 %45
    %v47 = vrsqrt.pop %v46
    %v48 = vmul.f32 %v46, %v47
    %vm49 = vcmp.eq.f32.partialorder %v46, inf
    %v50 = vsel %vm49, %v46, %v48
    %vm51 = vcmp.eq.f32.partialorder %v46, 0.0
    %v52 = vand.u32 %v46, 2147483648
    %v53 = vsel %vm51, %v52, %v50
    %v54 = vstv %s34
    %v55 = vsub.f32 %v53, %v54
    %s56 = sld [smem:[#allocation2]]
    %v57 = vmul.f32 %v55, %v55
    %v58 = vsel %vm40, %v57, 0.0
    %vm59 = vcmask 7168
    %v60 = vsel %vm59, %v58, 0.0
    %61 = vadd.xlane.f32.xlu0 %v60
    %v62 = vpop.xlane.xlu0 %61
    %v63 = vrot.slane %v62, 4
    %v64 = vadd.f32 %v62, %v63
    %v65 = vrot.slane %v64, 2
    %v66 = vadd.f32 %v64, %v65
    %v67 = vrot.slane %v66, 1
    %v68 = vadd.f32 %v66, %v67
    %s69 = vtos %v68
    %s70 = sadd.f32 %s56, %s69
    %s71 = scalar_lea.smem [#allocation2], 0
    %72 = sst [smem:[%s71]] %s70
    // Predicated region
    $region18: #{tpu_custom_call.1} parent=1 // pred_check
      %p73 = pneg %p25
    $region19: #{tpu_custom_call.1} parent=1 // pred_check_branch
      %75 = sbr.rel (%p73) target = $region21
    $region20: #{tpu_custom_call.1} parent=1 // pred_region
      %s76 = sld [smem:[#allocation2]]
      %s77 = smul.f32 %s76, 0.125
      %s78 = smul.f32 %s77, 0.5
      %s79 = scalar_lea.smem [#allocation7], 0
      %80 = sst [smem:[%s79]] %s78
    $region21: #{tpu_custom_call.1} parent=1 // pred_fallthru
      _
    // Predicated region
    $region22: #{tpu_custom_call.1} parent=1 // pred_check
      _
    $region23: #{tpu_custom_call.1} parent=1 // pred_check_branch
      %82 = sbr.rel (0) target = $region25
    $region24: #{tpu_custom_call.1} parent=1 // pred_region
      %s84 = ssub.s32 16, 16
      %85 = vsyncadd [#allocation6], %s84
      %88 = dma.smem_to_hbm [#allocation7], 16, %s2, [#allocation6]
    $region25: #{tpu_custom_call.1} parent=1 // pred_fallthru
      _
    // Predicated region
    $region26: #{tpu_custom_call.1} parent=1 // pred_check
      _
    $region27: #{tpu_custom_call.1} parent=1 // pred_check_branch
      %90 = sbr.rel (0) target = $region29
    $region28: #{tpu_custom_call.1} parent=1 // pred_region
      %91 = dma.done [#allocation6], 16
    $region29: #{tpu_custom_call.1} parent=1 // pred_fallthru
      _
    %92 = sfence
    %93 = vsyncpa [#allocation5], 1
    %94 = vsyncpa [#allocation6], 1

</llo_original>
